<compile_context>
chip_gen: v6e
topology: v6e:2x2x1
jax: 0.10.0
libtpu: 0.0.40
codegen_flags: <defaults>
</compile_context>

<pallas_src>
import numpy as np
import jax
import jax.numpy as jnp
from jax import lax
from jax.experimental import pallas as pl
from jax.experimental.pallas import tpu as pltpu


def build_g_mask(T: int, N: int) -> np.ndarray:
    """Deterministic reproduction of the module's __init__ g_mask buffer."""
    g = np.zeros((T, T, N * N), dtype=np.int8)
    for i in range(T):
        sp = max(0, i - 1)
        ep = min(T - 1, i + 1)
        g[i, sp:ep + 1, :] = 1  # intent of the torch assignment: fill with ones
    g = g.reshape(T, T, N, N).transpose(0, 2, 1, 3).reshape(T * N, T * N)
    return g


def _pick_tile(dim: int, cap: int, granule: int) -> int:
    """Largest tile <= cap that divides `dim` and is a multiple of `granule`;
    falls back to the full dim (always a legal block size)."""
    if dim <= cap:
        return dim
    t = (cap // granule) * granule
    while t >= granule:
        if dim % t == 0:
            return t
        t -= granule
    return dim


# ---------------------------------------------------------------------------
# Pass 1: L2-normalize rows (f32 math) and emit bf16 MXU operands.
# ---------------------------------------------------------------------------
def _normalize_kernel(x_ref, xn_ref):
    xf = x_ref[...].astype(jnp.float32)
    ss = jnp.sum(xf * xf, axis=-1, keepdims=True)
    # rsqrt(max(ss, 1e-24)) == 1 / max(||x||_2, 1e-12)  (F.normalize eps handling)
    inv = lax.rsqrt(jnp.maximum(ss, 1e-24))
    xn_ref[...] = (xf * inv).astype(xn_ref.dtype)


def _l2_normalize_bf16(x2: jax.Array, row_cap: int = 1024) -> jax.Array:
    R, D = x2.shape
    TR = _pick_tile(R, row_cap, 16)
    return pl.pallas_call(
        _normalize_kernel,
        out_shape=jax.ShapeDtypeStruct((R, D), jnp.bfloat16),
        grid_spec=pltpu.PrefetchScalarGridSpec(
            num_scalar_prefetch=0,
            grid=(R // TR,),
            in_specs=[pl.BlockSpec((TR, D), lambda r: (r, 0))],
            out_specs=pl.BlockSpec((TR, D), lambda r: (r, 0)),
        ),
        compiler_params=pltpu.CompilerParams(dimension_semantics=("parallel",)),
    )(x2)


# ---------------------------------------------------------------------------
# Pass 2: tiled similarity (bf16 MXU, f32 acc) + threshold + int8 mask select.
# ---------------------------------------------------------------------------
def _sim_mask_kernel(sim_th, xq_ref, xk_ref, gmask_ref, gm_ref):
    # xq_ref: (Bblk, TQ, D) bf16, xk_ref: (Bblk, TK, D) bf16
    # gmask_ref: (TQ, TK) int8, gm_ref: (Bblk, TQ, TK) int8
    sim = jnp.einsum("bqd,bkd->bqk", xq_ref[...], xk_ref[...],
                     preferred_element_type=jnp.float32)        # MXU, no transpose
    gmask = gmask_ref[...].astype(jnp.int32)                    # cheap i8 -> i32 unpack
    keep = (sim > sim_th) & (gmask != 0)                        # broadcasts over Bblk
    gm_ref[...] = jnp.where(keep, 1, 0).astype(jnp.int8)


def _graph_mask(xn: jax.Array, g_mask: jax.Array, sim_th: float,
                tq_cap: int = 256, tk_cap: int = 512) -> jax.Array:
    B, S, D = xn.shape
    TQ = _pick_tile(S, tq_cap, 32)    # sublane dim of int8 output tile
    TK = _pick_tile(S, tk_cap, 128)   # lane-dense output last dim
    # For small S, fold the whole batch into one grid step (amortizes per-step cost).
    Bblk = B if S <= 256 else 1
    while B % Bblk:
        Bblk -= 1
    grid = (B // Bblk, S // TQ, S // TK)

    kernel = lambda xq, xk, gm, out: _sim_mask_kernel(sim_th, xq, xk, gm, out)

    return pl.pallas_call(
        kernel,
        out_shape=jax.ShapeDtypeStruct((B, S, S), jnp.int8),
        grid_spec=pltpu.PrefetchScalarGridSpec(
            num_scalar_prefetch=0,
            grid=grid,
            in_specs=[
                pl.BlockSpec((Bblk, TQ, D), lambda b, qi, ki: (b, qi, 0)),  # row tile
                pl.BlockSpec((Bblk, TK, D), lambda b, qi, ki: (b, ki, 0)),  # col tile
                pl.BlockSpec((TQ, TK), lambda b, qi, ki: (qi, ki)),         # int8 mask
            ],
            out_specs=pl.BlockSpec((Bblk, TQ, TK), lambda b, qi, ki: (b, qi, ki)),
        ),
        compiler_params=pltpu.CompilerParams(
            dimension_semantics=("parallel", "parallel", "parallel")),
    )(xn, xn, g_mask)


def frame_times_graph_former(x: jax.Array, g_mask: jax.Array, sim_th: float = 0.88):
    """x: (B, T, L, D). Returns (x reshaped to (B, S, D), graph_mask (B, S, S) int8).

    The module's forward returns only the reshaped x; the reshape is metadata-only,
    so it is done in the wrapper. graph_mask (the hot computation) is produced by the
    Pallas kernels and returned for inspection/verification.
    """
    B, T, L, D = x.shape
    S = T * L
    x3 = x.reshape(B, S, D)                                   # module's return value
    xn = _l2_normalize_bf16(x3.reshape(B * S, D)).reshape(B, S, D)
    graph_mask = _graph_mask(xn, g_mask.astype(jnp.int8), sim_th)
    return x3, graph_mask


if __name__ == "__main__":
    # Small shapes consistent with the module: B=2 batches, T=4 frames,
    # L=N=8 tokens per frame, D=32 feature dim -> S = T*L = 32.
    B, T, L, D = 2, 4, 8, 32
    sim_th = 0.88

    key = jax.random.PRNGKey(0)
    x = jax.random.normal(key, (B, T, L, D), dtype=jnp.float32)
    g_mask = jnp.asarray(build_g_mask(T, L))   # (S, S) int8, matches module's buffer

    x_out, graph_mask = frame_times_graph_former(x, g_mask, sim_th)
    x_out = jax.block_until_ready(x_out)
    graph_mask = jax.block_until_ready(graph_mask)

    # Pure-JAX reference using the same bf16 operand rounding as the kernel's MXU path.
    x3 = x.reshape(B, T * L, D)
    ss = jnp.sum(x3 * x3, axis=-1, keepdims=True)
    xn_ref = (x3 * lax.rsqrt(jnp.maximum(ss, 1e-24))).astype(jnp.bfloat16)
    sim_ref = jnp.einsum("bqd,bkd->bqk", xn_ref, xn_ref,
                         preferred_element_type=jnp.float32)
    gm_ref = jnp.where((sim_ref > sim_th) & (g_mask[None] != 0), 1, 0).astype(jnp.int8)

    assert x_out.shape == (B, T * L, D)
    assert jnp.allclose(x_out, x3)
    # Strict match everywhere except a narrow band around the threshold (bf16 boundary
    # flips are the only tolerated difference, per the review's correctness note).
    mismatch = int(jnp.sum(
        (graph_mask.astype(jnp.int32) != gm_ref.astype(jnp.int32))
        & (jnp.abs(sim_ref - sim_th) > 5e-3)))
    assert mismatch == 0, f"graph_mask mismatch away from threshold boundary: {mismatch}"

    print("KERNEL_OK")
</pallas_src>

<mosaic_0001>
module attributes {stable_mosaic.version = 11 : i64} {
  func.func @_normalize_kernel(%arg0: i32, %arg1: memref<64x32xf32, #tpu.memory_space<vmem>>, %arg2: memref<64x32xbf16, #tpu.memory_space<vmem>>) attributes {dimension_semantics = [#tpu.dimension_semantics<parallel>], iteration_bounds = array<i64: 1>, scalar_prefetch = 0 : i64, scratch_operands = 0 : i64, tpu.core_type = #tpu.core_type<tc>, window_params = [{transform_indices = @transform_0, window_bounds = array<i64: 64, 32>}, {transform_indices = @transform_1, window_bounds = array<i64: 64, 32>}]} {
    %c0 = arith.constant 0 : index
    %c0_0 = arith.constant 0 : index
    %0 = vector.load %arg1[%c0, %c0_0] : memref<64x32xf32, #tpu.memory_space<vmem>>, vector<64x32xf32>
    %1 = arith.mulf %0, %0 : vector<64x32xf32>
    %cst = arith.constant dense<0.000000e+00> : vector<64xf32>
    %2 = vector.multi_reduction <add>, %1, %cst [1] : vector<64x32xf32> to vector<64xf32>
    %3 = vector.shape_cast %2 : vector<64xf32> to vector<64x1xf32>
    %cst_1 = arith.constant 1.000000e-24 : f32
    %4 = vector.broadcast %cst_1 : f32 to vector<64x1xf32>
    %5 = arith.maximumf %3, %4 : vector<64x1xf32>
    %6 = math.rsqrt %5 : vector<64x1xf32>
    %7 = vector.broadcast %6 : vector<64x1xf32> to vector<64x32xf32>
    %8 = arith.mulf %0, %7 : vector<64x32xf32>
    %9 = arith.truncf %8 : vector<64x32xf32> to vector<64x32xbf16>
    %c0_2 = arith.constant 0 : index
    %c0_3 = arith.constant 0 : index
    %10 = vector.load %arg2[%c0_2, %c0_3] : memref<64x32xbf16, #tpu.memory_space<vmem>>, vector<64x32xbf16>
    tpu.vector_store %arg2[%c0_2, %c0_3], %9 {strides = array<i32>} : memref<64x32xbf16, #tpu.memory_space<vmem>>, vector<64x32xbf16>,
    return
  }
  func.func @transform_0(%arg0: i32) -> (i32, i32) {
    %c0_i32 = arith.constant 0 : i32
    %c0_i32_0 = arith.constant 0 : i32
    return %arg0, %c0_i32 : i32, i32
  }
  func.func @transform_1(%arg0: i32) -> (i32, i32) {
    %c0_i32 = arith.constant 0 : i32
    %c0_i32_0 = arith.constant 0 : i32
    return %arg0, %c0_i32 : i32, i32
  }
}

</mosaic_0001>

<llo_original>
// kernel: tpu_custom_call.1
$region0: #{tpu_custom_call.1}
  #allocation0 [shape = 'u32[]', space=smem, size = 0x4, offset = 0x4, fixed_abs, tag = 'smem constant byte address 0x4 - core index']
  #allocation1 [shape = 'u32[144,128]{1,0:T(1,128)}', space=vmem, size = 0x12000, scoped, tag = 'internal scratch']
  %s0 = inlined_call_operand.vmem [shape: f32[64,32], index: 0, kind: input, shape index: {}]
  %s1 = inlined_call_operand.vmem [shape: bf16[64,32], index: 1, kind: output, shape index: {}]
  %s2 = sld [smem:[#allocation0]]
  $region14: #{tpu_custom_call.1} parent=0
    _
  %s4 = ssub.s32 1, %s2
  %s5 = scalar_select 0, %s4, %s2
  // Predicated region
  $region2: #{tpu_custom_call.1} parent=0 // pred_check
    _
  $region3: #{tpu_custom_call.1} parent=0 // pred_check_branch
    %7 = sbr.rel (0) target = $region5
  $region4: #{tpu_custom_call.1} parent=0 // pred_region
    _
  $region5: #{tpu_custom_call.1} parent=0 // pred_fallthru
    _
  %v8 = vld [vmem:[%s0] sm:$0xff]
  %v9 = vld [vmem:[%s0 + $0x8] sm:$0xff]
  %v10 = vld [vmem:[%s0 + $0x10] sm:$0xff]
  %v11 = vld [vmem:[%s0 + $0x18] sm:$0xff]
  %v12 = vld [vmem:[%s0 + $0x20] sm:$0xff]
  %v13 = vld [vmem:[%s0 + $0x28] sm:$0xff]
  %v14 = vld [vmem:[%s0 + $0x30] sm:$0xff]
  %v15 = vld [vmem:[%s0 + $0x38] sm:$0xff]
  %v16 = vmul.f32 %v8, %v8
  %v17 = vmul.f32 %v9, %v9
  %v18 = vmul.f32 %v10, %v10
  %v19 = vmul.f32 %v11, %v11
  %v20 = vmul.f32 %v12, %v12
  %v21 = vmul.f32 %v13, %v13
  %v22 = vmul.f32 %v14, %v14
  %v23 = vmul.f32 %v15, %v15
  %vm24 = vcmask 261120
  %v25 = vsel %vm24, %v16, 0.0
  %26 = vadd.xlane.f32.xlu0 %v25
  %v27 = vpop.xlane.xlu0 %26
  %v28 = vsel %vm24, %v17, 0.0
  %29 = vadd.xlane.f32.xlu0 %v28
  %v30 = vpop.xlane.xlu0 %29
  %v31 = vsel %vm24, %v18, 0.0
  %32 = vadd.xlane.f32.xlu0 %v31
  %v33 = vpop.xlane.xlu0 %32
  %v34 = vsel %vm24, %v19, 0.0
  %35 = vadd.xlane.f32.xlu0 %v34
  %v36 = vpop.xlane.xlu0 %35
  %v37 = vsel %vm24, %v20, 0.0
  %38 = vadd.xlane.f32.xlu0 %v37
  %v39 = vpop.xlane.xlu0 %38
  %v40 = vsel %vm24, %v21, 0.0
  %41 = vadd.xlane.f32.xlu0 %v40
  %v42 = vpop.xlane.xlu0 %41
  %v43 = vsel %vm24, %v22, 0.0
  %44 = vadd.xlane.f32.xlu0 %v43
  %v45 = vpop.xlane.xlu0 %44
  %v46 = vsel %vm24, %v23, 0.0
  %47 = vadd.xlane.f32.xlu0 %v46
  %v48 = vpop.xlane.xlu0 %47
  %v49 = vmax.f32 %v27, 1e-24
  %v50 = vmax.f32 %v30, 1e-24
  %v51 = vmax.f32 %v33, 1e-24
  %v52 = vmax.f32 %v36, 1e-24
  %v53 = vmax.f32 %v39, 1e-24
  %v54 = vmax.f32 %v42, 1e-24
  %v55 = vmax.f32 %v45, 1e-24
  %v56 = vmax.f32 %v48, 1e-24
  %v57 = vrsqrt.pop %v49
  %v58 = vrsqrt.pop %v50
  %v59 = vrsqrt.pop %v51
  %v60 = vrsqrt.pop %v52
  %v61 = vrsqrt.pop %v53
  %v62 = vrsqrt.pop %v54
  %v63 = vrsqrt.pop %v55
  %v64 = vrsqrt.pop %v56
  %v65 = vmul.f32 %v8, %v57
  %v66 = vmul.f32 %v9, %v58
  %v67 = vmul.f32 %v10, %v59
  %v68 = vmul.f32 %v11, %v60
  %v69 = vmul.f32 %v12, %v61
  %v70 = vmul.f32 %v13, %v62
  %v71 = vmul.f32 %v14, %v63
  %v72 = vmul.f32 %v15, %v64
  %v73 = vpack.c.bf16 %v66, %v65
  %v74 = vpack.c.bf16 %v68, %v67
  %v75 = vpack.c.bf16 %v70, %v69
  %v76 = vpack.c.bf16 %v72, %v71
  %v81 = vunpack.c.l.b16 %v73
  %v82 = vunpack.c.h.b16 %v73
  %v83 = vunpack.c.l.b16 %v74
  %v84 = vunpack.c.h.b16 %v74
  %v85 = vunpack.c.l.b16 %v75
  %v86 = vunpack.c.h.b16 %v75
  %v87 = vunpack.c.l.b16 %v76
  %v88 = vunpack.c.h.b16 %v76
  %v89 = vpack.c.b16 %v81, %v81
  %v90 = vpack.c.b16 %v82, %v82
  %v91 = vpack.c.b16 %v83, %v83
  %v92 = vpack.c.b16 %v84, %v84
  %v93 = vpack.c.b16 %v85, %v85
  %v94 = vpack.c.b16 %v86, %v86
  %v95 = vpack.c.b16 %v87, %v87
  %v96 = vpack.c.b16 %v88, %v88
  %vm105 = vcmask 257024
  %106 = vst.msk [vmem:[%s1] sm:$0xf] %vm105, %v89
  %107 = vst.msk [vmem:[%s1 + $0x4] sm:$0xf] %vm105, %v90
  %108 = vst.msk [vmem:[%s1 + $0x8] sm:$0xf] %vm105, %v91
  %109 = vst.msk [vmem:[%s1 + $0xc] sm:$0xf] %vm105, %v92
  %110 = vst.msk [vmem:[%s1 + $0x10] sm:$0xf] %vm105, %v93
  %111 = vst.msk [vmem:[%s1 + $0x14] sm:$0xf] %vm105, %v94
  %112 = vst.msk [vmem:[%s1 + $0x18] sm:$0xf] %vm105, %v95
  %113 = vst.msk [vmem:[%s1 + $0x1c] sm:$0xf] %vm105, %v96
  // Predicated region
  $region6: #{tpu_custom_call.1} parent=0 // pred_check
    _
  $region7: #{tpu_custom_call.1} parent=0 // pred_check_branch
    %115 = sbr.rel (0) target = $region9
  $region8: #{tpu_custom_call.1} parent=0 // pred_region
    _
  $region9: #{tpu_custom_call.1} parent=0 // pred_fallthru
    _
  // Predicated region
  $region10: #{tpu_custom_call.1} parent=0 // pred_check
    _
  $region11: #{tpu_custom_call.1} parent=0 // pred_check_branch
    %117 = sbr.rel (0) target = $region13
  $region12: #{tpu_custom_call.1} parent=0 // pred_region
    _
  $region13: #{tpu_custom_call.1} parent=0 // pred_fallthru
    _

</llo_original>
